<compile_context>
chip_gen: v5e
topology: v5e:2x2
jax: 0.10.0
libtpu: 0.0.40
codegen_flags: <defaults>
</compile_context>

<pallas_src>
import functools

import jax
import jax.numpy as jnp
from jax.experimental import pallas as pl
from jax.experimental.pallas import tpu as pltpu


_BN_EPS = 1e-5
_PADW = 8  # left halo keeps the depthwise interior scratch store sublane-aligned


def _round_up(x, m):
    return (x + m - 1) // m * m


def _pick_tile(M, cap=1024, mult=16, allow_ragged=True):
    """Row tile for the 1x1-conv style kernels.

    Prefers (a) the whole extent when small, (b) the largest multiple of `mult`
    <= cap that divides M, otherwise (c) `cap` with a masked ragged tail
    (allow_ragged=True) or the full extent (exact-sum kernels)."""
    if M <= cap:
        return M
    t = (cap // mult) * mult
    while t >= mult:
        if M % t == 0:
            return t
        t -= mult
    return cap if allow_ragged else M


def _pick_strip(H, stride, cap=16):
    """Depthwise H-strip height in INPUT rows: divides H, multiple of stride."""
    if H <= cap:
        return H
    t = min(cap, H)
    t -= t % stride
    while t >= stride:
        if H % t == 0:
            return t
        t -= stride
    return H


# ---------------------------------------------------------------------------
# Kernel 1a: fused 1x1 expand conv (matmul, BN folded into weights) + ReLU
# ---------------------------------------------------------------------------
def _conv1x1_relu_kernel(x_ref, w_ref, b_ref, o_ref):
    y = jnp.dot(x_ref[...], w_ref[...], preferred_element_type=jnp.float32)
    o_ref[...] = jnp.maximum(y + b_ref[...], 0.0).astype(o_ref.dtype)


def conv1x1_bn_relu(x2d, w, bias, out_dtype):
    """x2d: (M, Cin); w: (Cin, Cout) BN-scaled; bias: (1, Cout) f32."""
    M, Cin = x2d.shape
    Cout = w.shape[1]
    tm = _pick_tile(M)
    return pl.pallas_call(
        _conv1x1_relu_kernel,
        out_shape=jax.ShapeDtypeStruct((M, Cout), out_dtype),
        grid=(pl.cdiv(M, tm),),
        in_specs=[
            pl.BlockSpec((tm, Cin), lambda i: (i, 0)),
            pl.BlockSpec((Cin, Cout), lambda i: (0, 0)),
            pl.BlockSpec((1, Cout), lambda i: (0, 0)),
        ],
        out_specs=pl.BlockSpec((tm, Cout), lambda i: (i, 0)),
        compiler_params=pltpu.CompilerParams(dimension_semantics=("parallel",)),
    )(x2d, w, bias)


# ---------------------------------------------------------------------------
# Kernel 1b: fused expand conv (ReLU) + shortcut projection conv, one input read
# ---------------------------------------------------------------------------
def _conv1x1_dual_kernel(x_ref, w1_ref, b1_ref, ws_ref, bs_ref, o1_ref, os_ref):
    x = x_ref[...]
    y1 = jnp.dot(x, w1_ref[...], preferred_element_type=jnp.float32) + b1_ref[...]
    o1_ref[...] = jnp.maximum(y1, 0.0).astype(o1_ref.dtype)
    ys = jnp.dot(x, ws_ref[...], preferred_element_type=jnp.float32) + bs_ref[...]
    os_ref[...] = ys.astype(os_ref.dtype)


def conv1x1_dual(x2d, w1, b1, ws, bs, out_dtype):
    M, Cin = x2d.shape
    C1, Cs = w1.shape[1], ws.shape[1]
    tm = _pick_tile(M)
    return pl.pallas_call(
        _conv1x1_dual_kernel,
        out_shape=(jax.ShapeDtypeStruct((M, C1), out_dtype),
                   jax.ShapeDtypeStruct((M, Cs), out_dtype)),
        grid=(pl.cdiv(M, tm),),
        in_specs=[
            pl.BlockSpec((tm, Cin), lambda i: (i, 0)),
            pl.BlockSpec((Cin, C1), lambda i: (0, 0)),
            pl.BlockSpec((1, C1), lambda i: (0, 0)),
            pl.BlockSpec((Cin, Cs), lambda i: (0, 0)),
            pl.BlockSpec((1, Cs), lambda i: (0, 0)),
        ],
        out_specs=(pl.BlockSpec((tm, C1), lambda i: (i, 0)),
                   pl.BlockSpec((tm, Cs), lambda i: (i, 0))),
        compiler_params=pltpu.CompilerParams(dimension_semantics=("parallel",)),
    )(x2d, w1, b1, ws, bs)


# ---------------------------------------------------------------------------
# Kernel 2: depthwise 3x3 conv + BN (scale folded into taps) + ReLU.
#   * H-strip tiling with a 1-row halo (two extra 1-row reads of the input)
#   * strip-sized pad scratch in the input dtype; only pad columns zeroed
#   * stride folded in (only strided outputs are computed / written)
# ---------------------------------------------------------------------------
def _dwconv3x3_bn_relu_kernel(x_ref, xt_ref, xb_ref, w_ref, b_ref, o_ref,
                              xpad_ref, *, stride):
    _, th, W, C = x_ref.shape
    _, th_out, Wo, _ = o_ref.shape
    s = pl.program_id(2)
    last = pl.num_programs(2) - 1
    padl = _PADW

    # Zero only the two halo columns the taps actually read; interior and halo
    # rows are fully overwritten every step.
    zcol = jnp.zeros((1, th + 2, 1, C), xpad_ref.dtype)
    xpad_ref[:, :, padl - 1:padl, :] = zcol
    xpad_ref[:, :, padl + W:padl + W + 1, :] = zcol

    # Halo rows (neighbouring strips' edge rows); zeroed at the image borders.
    top = xt_ref[...]
    bot = xb_ref[...]
    top = jnp.where(s == 0, jnp.zeros_like(top), top)
    bot = jnp.where(s == last, jnp.zeros_like(bot), bot)
    xpad_ref[:, 0:1, padl:padl + W, :] = top
    xpad_ref[:, th + 1:th + 2, padl:padl + W, :] = bot
    xpad_ref[:, 1:th + 1, padl:padl + W, :] = x_ref[...]

    acc = jnp.zeros((1, th_out, Wo, C), jnp.float32)
    if stride == 1:
        # Hoist the sublane-axis (W) shift: one shifted read per kw, cheap
        # non-minor-dim slices along H for the three kh taps.
        for kw in range(3):
            xw = xpad_ref[:, :, padl - 1 + kw:padl - 1 + kw + Wo, :]
            xw = xw.astype(jnp.float32)
            for kh in range(3):
                k = kh * 3 + kw
                acc = acc + xw[:, kh:kh + th_out, :, :] * w_ref[k:k + 1, :]
    else:
        # TODO(synk): replace the strided sublane (W) read with an even/odd
        # lane select for stride==2 (strided W reads lower to gather/rotates).
        for kh in range(3):
            for kw in range(3):
                k = kh * 3 + kw
                patch = xpad_ref[:, pl.ds(kh, th_out, stride),
                                 pl.ds(padl - 1 + kw, Wo, stride), :]
                acc = acc + patch.astype(jnp.float32) * w_ref[k:k + 1, :]

    o_ref[...] = jnp.maximum(acc + b_ref[...], 0.0).astype(o_ref.dtype)


def dwconv3x3_bn_relu(x, w9, bias, stride, out_dtype):
    """x: (N, H, W, C) NHWC; w9: (9, C) f32 BN-scaled taps; bias: (1, C) f32."""
    N, H, W, C = x.shape
    Ho = (H + 2 - 3) // stride + 1
    Wo = (W + 2 - 3) // stride + 1
    tc = 128 if (C > 128 and C % 128 == 0) else C
    th = _pick_strip(H, stride)
    if th == H:
        n_strips, th_out = 1, Ho
    else:
        n_strips, th_out = H // th, th // stride
        assert n_strips * th_out == Ho

    def strip_map(c, n, s):
        return (n, s, 0, c)

    def top_map(c, n, s):
        return (n, jnp.maximum(s * th - 1, 0), 0, c)

    def bot_map(c, n, s):
        return (n, jnp.minimum(s * th + th, H - 1), 0, c)

    return pl.pallas_call(
        functools.partial(_dwconv3x3_bn_relu_kernel, stride=stride),
        out_shape=jax.ShapeDtypeStruct((N, Ho, Wo, C), out_dtype),
        grid=(C // tc, N, n_strips),
        in_specs=[
            pl.BlockSpec((1, th, W, tc), strip_map),
            pl.BlockSpec((1, 1, W, tc), top_map),
            pl.BlockSpec((1, 1, W, tc), bot_map),
            pl.BlockSpec((9, tc), lambda c, n, s: (0, c)),
            pl.BlockSpec((1, tc), lambda c, n, s: (0, c)),
        ],
        out_specs=pl.BlockSpec((1, th_out, Wo, tc), strip_map),
        scratch_shapes=[pltpu.VMEM((1, th + 2, W + 2 * _PADW, tc), x.dtype)],
        compiler_params=pltpu.CompilerParams(
            dimension_semantics=("parallel", "parallel", "parallel")),
    )(x, x, x, w9, bias)


# ---------------------------------------------------------------------------
# Kernel 3: 1x1 projection conv + BN (scale folded) with the full SE branch
#           (global average pool + fc1/relu + fc2/sigmoid) fused into the
#           last-tile epilogue; pooled sums live in a VMEM scratch.
# ---------------------------------------------------------------------------
def _proj_pool_gate_kernel(x_ref, w_ref, b_ref, w1_ref, b1_ref, w2_ref, b2_ref,
                           o_ref, gate_ref, sum_ref, *, inv_s):
    t = pl.program_id(1)
    y = jnp.dot(x_ref[0], w_ref[...], preferred_element_type=jnp.float32)
    y = y + b_ref[...]
    o_ref[0] = y.astype(o_ref.dtype)
    ysum = jnp.sum(y, axis=0, keepdims=True)           # (1, Cout) f32

    @pl.when(t == 0)
    def _init():
        sum_ref[...] = ysum

    @pl.when(t != 0)
    def _accum():
        sum_ref[...] = sum_ref[...] + ysum

    @pl.when(t == pl.num_programs(1) - 1)
    def _gate():
        pooled = sum_ref[...] * inv_s                  # global average pool
        h = jnp.dot(pooled, w1_ref[...], preferred_element_type=jnp.float32)
        h = jnp.maximum(h + b1_ref[...], 0.0)
        g = jnp.dot(h, w2_ref[...], preferred_element_type=jnp.float32)
        g = g + b2_ref[...]
        gate_ref[0] = 1.0 / (1.0 + jnp.exp(-g))        # sigmoid, (1, Cout)


def conv_proj_pool_gate(x3d, w, bias, fc1_w, fc1_b, fc2_w, fc2_b, out_dtype):
    """x3d: (N, S, Cin). Returns (out (N,S,Cout), SE gate (N,1,Cout) f32)."""
    N, S, Cin = x3d.shape
    Cout = w.shape[1]
    Chp = fc1_w.shape[1]
    tb = _pick_tile(S, allow_ragged=False)   # no ragged tail: SE mean stays exact
    return pl.pallas_call(
        functools.partial(_proj_pool_gate_kernel, inv_s=1.0 / float(S)),
        out_shape=(jax.ShapeDtypeStruct((N, S, Cout), out_dtype),
                   jax.ShapeDtypeStruct((N, 1, Cout), jnp.float32)),
        grid=(N, S // tb),
        in_specs=[
            pl.BlockSpec((1, tb, Cin), lambda n, t: (n, t, 0)),
            pl.BlockSpec((Cin, Cout), lambda n, t: (0, 0)),
            pl.BlockSpec((1, Cout), lambda n, t: (0, 0)),
            pl.BlockSpec((Cout, Chp), lambda n, t: (0, 0)),
            pl.BlockSpec((1, Chp), lambda n, t: (0, 0)),
            pl.BlockSpec((Chp, Cout), lambda n, t: (0, 0)),
            pl.BlockSpec((1, Cout), lambda n, t: (0, 0)),
        ],
        out_specs=(pl.BlockSpec((1, tb, Cout), lambda n, t: (n, t, 0)),
                   pl.BlockSpec((1, 1, Cout), lambda n, t: (n, 0, 0))),
        scratch_shapes=[pltpu.VMEM((1, Cout), jnp.float32)],
        compiler_params=pltpu.CompilerParams(
            dimension_semantics=("parallel", "arbitrary")),
    )(x3d, w, bias, fc1_w, fc1_b, fc2_w, fc2_b)


# ---------------------------------------------------------------------------
# Kernel 4: combine  out = out * gate + shortcut   (3 operands only)
# ---------------------------------------------------------------------------
def _scale_add_kernel(gate_ref, y_ref, sc_ref, o_ref):
    g = gate_ref[0]                                    # (1, C) f32
    o_ref[0] = (y_ref[0].astype(jnp.float32) * g
                + sc_ref[0].astype(jnp.float32)).astype(o_ref.dtype)


def scale_add(gate, y, sc):
    N, S, C = y.shape
    tb = _pick_tile(S)
    return pl.pallas_call(
        _scale_add_kernel,
        out_shape=jax.ShapeDtypeStruct((N, S, C), jnp.float32),
        grid=(N, pl.cdiv(S, tb)),
        in_specs=[
            pl.BlockSpec((1, 1, C), lambda n, t: (n, 0, 0)),
            pl.BlockSpec((1, tb, C), lambda n, t: (n, t, 0)),
            pl.BlockSpec((1, tb, C), lambda n, t: (n, t, 0)),
        ],
        out_specs=pl.BlockSpec((1, tb, C), lambda n, t: (n, t, 0)),
        compiler_params=pltpu.CompilerParams(
            dimension_semantics=("parallel", "parallel")),
    )(gate, y, sc)


# ---------------------------------------------------------------------------
# Glue: BatchNorm folding + full Block forward
# ---------------------------------------------------------------------------
def fold_bn(p):
    scale = p["gamma"] / jnp.sqrt(p["var"] + _BN_EPS)
    bias = p["beta"] - p["mean"] * scale
    return scale.reshape(1, -1), bias.reshape(1, -1)


def block_forward(x_nchw, params, stride, compute_dtype=jnp.bfloat16):
    """compute_dtype: dtype of inter-kernel activations (f32 accumulation is
    always used inside the kernels).  Final output is f32 NCHW."""
    N, Cin, H, W = x_nchw.shape
    planes = params["w1"].shape[0]
    out_planes = params["w3"].shape[0]

    # NHWC, directly in the compute dtype (no extra f32 copy).
    x = jnp.transpose(x_nchw, (0, 2, 3, 1)).astype(compute_dtype)
    x2d = x.reshape(N * H * W, Cin)

    # --- conv1 (expand 1x1) + bn1 (scale folded) + relu, shortcut fused ------
    s1, b1 = fold_bn(params["bn1"])
    w1 = (params["w1"][:, :, 0, 0].T * s1).astype(compute_dtype)

    need_proj_shortcut = (stride == 1 and Cin != out_planes)
    if need_proj_shortcut:
        ss, bs = fold_bn(params["bns"])
        ws = (params["ws"][:, :, 0, 0].T * ss).astype(compute_dtype)
        out, sc2d = conv1x1_dual(x2d, w1, b1, ws, bs, out_dtype=compute_dtype)
    else:
        out = conv1x1_bn_relu(x2d, w1, b1, out_dtype=compute_dtype)
        sc2d = None
    out = out.reshape(N, H, W, planes)

    # --- conv2 (depthwise 3x3, pad & stride folded in) + bn2 + relu ----------
    s2, b2 = fold_bn(params["bn2"])
    wdw = jnp.transpose(params["w2"][:, 0, :, :], (1, 2, 0)).reshape(9, planes)
    wdw = wdw * s2                                                  # f32 taps
    out = dwconv3x3_bn_relu(out, wdw, b2, stride, out_dtype=compute_dtype)
    Ho, Wo = out.shape[1], out.shape[2]
    S = Ho * Wo

    # --- conv3 (project 1x1) + bn3 + fused SE pool/fc1/fc2/sigmoid -----------
    s3, b3 = fold_bn(params["bn3"])
    w3 = (params["w3"][:, :, 0, 0].T * s3).astype(compute_dtype)

    Ch = params["fc1_w"].shape[0]
    Chp = max(8, _round_up(Ch, 8))            # zero-pad hidden dim (exact math)
    fc1_w = jnp.zeros((out_planes, Chp), jnp.float32).at[:, :Ch].set(
        params["fc1_w"][:, :, 0, 0].T)
    fc1_b = jnp.zeros((1, Chp), jnp.float32).at[:, :Ch].set(
        params["fc1_b"].reshape(1, -1))
    fc2_w = jnp.zeros((Chp, out_planes), jnp.float32).at[:Ch, :].set(
        params["fc2_w"][:, :, 0, 0].T)
    fc2_b = params["fc2_b"].reshape(1, -1).astype(jnp.float32)

    out3, gate = conv_proj_pool_gate(out.reshape(N, S, planes), w3, b3,
                                     fc1_w, fc1_b, fc2_w, fc2_b,
                                     out_dtype=compute_dtype)

    # --- shortcut -------------------------------------------------------------
    if stride == 1:
        if Cin != out_planes:
            sc = sc2d.reshape(N, S, out_planes)
        else:
            sc = x.reshape(N, S, out_planes)
    else:
        sc = out3

    # --- combine  out = out3 * gate + shortcut --------------------------------
    out = scale_add(gate, out3, sc)
    out = out.reshape(N, Ho, Wo, out_planes)
    return jnp.transpose(out, (0, 3, 1, 2))                      # back to NCHW


# ---------------------------------------------------------------------------
# Pure-JAX (lax.conv) reference for correctness checking
# ---------------------------------------------------------------------------
def reference_block(x, params, stride):
    def conv(x, w, strides=(1, 1), padding="VALID", groups=1):
        return jax.lax.conv_general_dilated(
            x, w, strides, padding,
            dimension_numbers=("NCHW", "OIHW", "NCHW"),
            feature_group_count=groups)

    def bn(x, p):
        scale = p["gamma"] / jnp.sqrt(p["var"] + _BN_EPS)
        bias = p["beta"] - p["mean"] * scale
        return x * scale[None, :, None, None] + bias[None, :, None, None]

    out = jax.nn.relu(bn(conv(x, params["w1"]), params["bn1"]))
    out = jax.nn.relu(bn(conv(out, params["w2"], (stride, stride),
                              ((1, 1), (1, 1)), groups=params["w2"].shape[0]),
                         params["bn2"]))
    out = bn(conv(out, params["w3"]), params["bn3"])
    if stride == 1:
        if x.shape[1] != out.shape[1]:
            shortcut = bn(conv(x, params["ws"]), params["bns"])
        else:
            shortcut = x
    else:
        shortcut = out
    w = jnp.mean(out, axis=(2, 3), keepdims=True)
    w = jax.nn.relu(conv(w, params["fc1_w"]) + params["fc1_b"][None, :, None, None])
    w = jax.nn.sigmoid(conv(w, params["fc2_w"]) + params["fc2_b"][None, :, None, None])
    return out * w + shortcut


# ---------------------------------------------------------------------------
if __name__ == "__main__":
    key = jax.random.PRNGKey(0)
    B, in_planes, H, W = 2, 8, 8, 8
    expansion, out_planes, stride = 2, 16, 1
    planes = expansion * in_planes
    se_hidden = out_planes // 16

    def init_bn(k, c):
        k1, k2, k3, k4 = jax.random.split(k, 4)
        return {
            "gamma": jax.random.uniform(k1, (c,), minval=0.5, maxval=1.5),
            "beta": jax.random.normal(k2, (c,)) * 0.1,
            "mean": jax.random.normal(k3, (c,)) * 0.1,
            "var": jax.random.uniform(k4, (c,), minval=0.5, maxval=1.5),
        }

    ks = jax.random.split(key, 14)
    params = {
        "w1": jax.random.normal(ks[0], (planes, in_planes, 1, 1)) * 0.2,
        "bn1": init_bn(ks[1], planes),
        "w2": jax.random.normal(ks[2], (planes, 1, 3, 3)) * 0.2,
        "bn2": init_bn(ks[3], planes),
        "w3": jax.random.normal(ks[4], (out_planes, planes, 1, 1)) * 0.2,
        "bn3": init_bn(ks[5], out_planes),
        "ws": jax.random.normal(ks[6], (out_planes, in_planes, 1, 1)) * 0.2,
        "bns": init_bn(ks[7], out_planes),
        "fc1_w": jax.random.normal(ks[8], (se_hidden, out_planes, 1, 1)) * 0.2,
        "fc1_b": jax.random.normal(ks[9], (se_hidden,)) * 0.1,
        "fc2_w": jax.random.normal(ks[10], (out_planes, se_hidden, 1, 1)) * 0.2,
        "fc2_b": jax.random.normal(ks[11], (out_planes,)) * 0.1,
    }
    x = jax.random.normal(ks[12], (B, in_planes, H, W), dtype=jnp.float32)

    ref = reference_block(x, params, stride)

    # f32 intermediates: tight numerical check.
    out_f32 = jax.block_until_ready(
        block_forward(x, params, stride, compute_dtype=jnp.float32))
    assert out_f32.shape == ref.shape, (out_f32.shape, ref.shape)
    err32 = float(jnp.max(jnp.abs(out_f32 - ref)))
    assert err32 < 1e-3, f"f32 path mismatch vs reference: {err32}"

    # bf16 intermediates (default perf path): looser check.
    out_bf16 = jax.block_until_ready(
        block_forward(x, params, stride, compute_dtype=jnp.bfloat16))
    err16 = float(jnp.max(jnp.abs(out_bf16 - ref)))
    tol16 = 3e-2 * (float(jnp.max(jnp.abs(ref))) + 1.0)
    assert err16 < tol16, f"bf16 path mismatch vs reference: {err16} > {tol16}"

    print("KERNEL_OK")
</pallas_src>

<mosaic_0001>
module attributes {stable_mosaic.version = 11 : i64} {
  func.func @_conv1x1_dual_kernel(%arg0: i32, %arg1: memref<128x8xf32, #tpu.memory_space<vmem>>, %arg2: memref<8x16xf32, #tpu.memory_space<vmem>>, %arg3: memref<1x16xf32, #tpu.memory_space<vmem>>, %arg4: memref<8x16xf32, #tpu.memory_space<vmem>>, %arg5: memref<1x16xf32, #tpu.memory_space<vmem>>, %arg6: memref<128x16xf32, #tpu.memory_space<vmem>>, %arg7: memref<128x16xf32, #tpu.memory_space<vmem>>) attributes {dimension_semantics = [#tpu.dimension_semantics<parallel>], iteration_bounds = array<i64: 1>, scalar_prefetch = 0 : i64, scratch_operands = 0 : i64, tpu.core_type = #tpu.core_type<tc>, window_params = [{transform_indices = @transform_0, window_bounds = array<i64: 128, 8>}, {pipeline_mode = #tpu.pipeline_mode<synchronous>, transform_indices = @transform_1, window_bounds = array<i64: 8, 16>}, {pipeline_mode = #tpu.pipeline_mode<synchronous>, transform_indices = @transform_2, window_bounds = array<i64: 1, 16>}, {pipeline_mode = #tpu.pipeline_mode<synchronous>, transform_indices = @transform_3, window_bounds = array<i64: 8, 16>}, {pipeline_mode = #tpu.pipeline_mode<synchronous>, transform_indices = @transform_4, window_bounds = array<i64: 1, 16>}, {transform_indices = @transform_5, window_bounds = array<i64: 128, 16>}, {transform_indices = @transform_6, window_bounds = array<i64: 128, 16>}]} {
    %c0 = arith.constant 0 : index
    %c0_0 = arith.constant 0 : index
    %0 = vector.load %arg1[%c0, %c0_0] : memref<128x8xf32, #tpu.memory_space<vmem>>, vector<128x8xf32>
    %c0_1 = arith.constant 0 : index
    %c0_2 = arith.constant 0 : index
    %1 = vector.load %arg2[%c0_1, %c0_2] : memref<8x16xf32, #tpu.memory_space<vmem>>, vector<8x16xf32>
    %cst = arith.constant dense<0.000000e+00> : vector<128x16xf32>
    %2 = tpu.matmul %0, %1, %cst {dimension_numbers = #tpu.dot_dimension_numbers<[1], [0], [0], [1], [0, 0, 1, 1], [], []>} : vector<128x8xf32>, vector<8x16xf32>, vector<128x16xf32> -> vector<128x16xf32>
    %c0_3 = arith.constant 0 : index
    %c0_4 = arith.constant 0 : index
    %3 = vector.load %arg3[%c0_3, %c0_4] : memref<1x16xf32, #tpu.memory_space<vmem>>, vector<1x16xf32>
    %4 = vector.broadcast %3 : vector<1x16xf32> to vector<128x16xf32>
    %5 = arith.addf %2, %4 : vector<128x16xf32>
    %cst_5 = arith.constant 0.000000e+00 : f32
    %6 = vector.broadcast %cst_5 : f32 to vector<128x16xf32>
    %7 = arith.maximumf %5, %6 : vector<128x16xf32>
    %c0_6 = arith.constant 0 : index
    %c0_7 = arith.constant 0 : index
    %8 = vector.load %arg6[%c0_6, %c0_7] : memref<128x16xf32, #tpu.memory_space<vmem>>, vector<128x16xf32>
    tpu.vector_store %arg6[%c0_6, %c0_7], %7 {strides = array<i32>} : memref<128x16xf32, #tpu.memory_space<vmem>>, vector<128x16xf32>,
    %c0_8 = arith.constant 0 : index
    %c0_9 = arith.constant 0 : index
    %9 = vector.load %arg4[%c0_8, %c0_9] : memref<8x16xf32, #tpu.memory_space<vmem>>, vector<8x16xf32>
    %cst_10 = arith.constant dense<0.000000e+00> : vector<128x16xf32>
    %10 = tpu.matmul %0, %9, %cst_10 {dimension_numbers = #tpu.dot_dimension_numbers<[1], [0], [0], [1], [0, 0, 1, 1], [], []>} : vector<128x8xf32>, vector<8x16xf32>, vector<128x16xf32> -> vector<128x16xf32>
    %c0_11 = arith.constant 0 : index
    %c0_12 = arith.constant 0 : index
    %11 = vector.load %arg5[%c0_11, %c0_12] : memref<1x16xf32, #tpu.memory_space<vmem>>, vector<1x16xf32>
    %12 = vector.broadcast %11 : vector<1x16xf32> to vector<128x16xf32>
    %13 = arith.addf %10, %12 : vector<128x16xf32>
    %c0_13 = arith.constant 0 : index
    %c0_14 = arith.constant 0 : index
    %14 = vector.load %arg7[%c0_13, %c0_14] : memref<128x16xf32, #tpu.memory_space<vmem>>, vector<128x16xf32>
    tpu.vector_store %arg7[%c0_13, %c0_14], %13 {strides = array<i32>} : memref<128x16xf32, #tpu.memory_space<vmem>>, vector<128x16xf32>,
    return
  }
  func.func @transform_0(%arg0: i32) -> (i32, i32) {
    %c0_i32 = arith.constant 0 : i32
    %c0_i32_0 = arith.constant 0 : i32
    return %arg0, %c0_i32 : i32, i32
  }
  func.func @transform_1(%arg0: i32) -> (i32, i32) {
    %c0_i32 = arith.constant 0 : i32
    %c0_i32_0 = arith.constant 0 : i32
    %c0_i32_1 = arith.constant 0 : i32
    return %c0_i32, %c0_i32_0 : i32, i32
  }
  func.func @transform_2(%arg0: i32) -> (i32, i32) {
    %c0_i32 = arith.constant 0 : i32
    %c0_i32_0 = arith.constant 0 : i32
    %c0_i32_1 = arith.constant 0 : i32
    return %c0_i32, %c0_i32_0 : i32, i32
  }
  func.func @transform_3(%arg0: i32) -> (i32, i32) {
    %c0_i32 = arith.constant 0 : i32
    %c0_i32_0 = arith.constant 0 : i32
    %c0_i32_1 = arith.constant 0 : i32
    return %c0_i32, %c0_i32_0 : i32, i32
  }
  func.func @transform_4(%arg0: i32) -> (i32, i32) {
    %c0_i32 = arith.constant 0 : i32
    %c0_i32_0 = arith.constant 0 : i32
    %c0_i32_1 = arith.constant 0 : i32
    return %c0_i32, %c0_i32_0 : i32, i32
  }
  func.func @transform_5(%arg0: i32) -> (i32, i32) {
    %c0_i32 = arith.constant 0 : i32
    %c0_i32_0 = arith.constant 0 : i32
    return %arg0, %c0_i32 : i32, i32
  }
  func.func @transform_6(%arg0: i32) -> (i32, i32) {
    %c0_i32 = arith.constant 0 : i32
    %c0_i32_0 = arith.constant 0 : i32
    return %arg0, %c0_i32 : i32, i32
  }
}

</mosaic_0001>

<llo_original>
// kernel: tpu_custom_call.1
$region0: #{tpu_custom_call.1}
  #allocation0 [shape = 'u32[]', space=smem, size = 0x4, offset = 0x4, fixed_abs, tag = 'smem constant byte address 0x4 - core index']
  #allocation1 [shape = 'u32[72,128]{1,0:T(1,128)}', space=vmem, size = 0x9000, scoped, tag = 'internal scratch']
  %s0 = inlined_call_operand.vmem [shape: f32[128,8], index: 0, kind: input, shape index: {}]
  %s1 = inlined_call_operand.vmem [shape: f32[8,16], index: 1, kind: input, shape index: {}]
  %s2 = inlined_call_operand.vmem [shape: f32[1,16], index: 2, kind: input, shape index: {}]
  %s3 = inlined_call_operand.vmem [shape: f32[8,16], index: 3, kind: input, shape index: {}]
  %s4 = inlined_call_operand.vmem [shape: f32[1,16], index: 4, kind: input, shape index: {}]
  %s5 = inlined_call_operand.vmem [shape: f32[128,16], index: 5, kind: output, shape index: {0}]
  %s6 = inlined_call_operand.vmem [shape: f32[128,16], index: 6, kind: output, shape index: {1}]
  %7 = xla_tuple %s5, %s6
  %s8 = sld [smem:[#allocation0]]
  $region38: #{tpu_custom_call.1} parent=0
    _
  %s10 = ssub.s32 1, %s8
  %s11 = scalar_select 0, %s10, %s8
  // Predicated region
  $region2: #{tpu_custom_call.1} parent=0 // pred_check
    _
  $region3: #{tpu_custom_call.1} parent=0 // pred_check_branch
    %13 = sbr.rel (0) target = $region5
  $region4: #{tpu_custom_call.1} parent=0 // pred_region
    _
  $region5: #{tpu_custom_call.1} parent=0 // pred_fallthru
    _
  // Predicated region
  $region6: #{tpu_custom_call.1} parent=0 // pred_check
    _
  $region7: #{tpu_custom_call.1} parent=0 // pred_check_branch
    %15 = sbr.rel (0) target = $region9
  $region8: #{tpu_custom_call.1} parent=0 // pred_region
    _
  $region9: #{tpu_custom_call.1} parent=0 // pred_fallthru
    _
  // Predicated region
  $region10: #{tpu_custom_call.1} parent=0 // pred_check
    _
  $region11: #{tpu_custom_call.1} parent=0 // pred_check_branch
    %17 = sbr.rel (0) target = $region13
  $region12: #{tpu_custom_call.1} parent=0 // pred_region
    _
  $region13: #{tpu_custom_call.1} parent=0 // pred_fallthru
    _
  // Predicated region
  $region14: #{tpu_custom_call.1} parent=0 // pred_check
    _
  $region15: #{tpu_custom_call.1} parent=0 // pred_check_branch
    %19 = sbr.rel (0) target = $region17
  $region16: #{tpu_custom_call.1} parent=0 // pred_region
    _
  $region17: #{tpu_custom_call.1} parent=0 // pred_fallthru
    _
  // Predicated region
  $region18: #{tpu_custom_call.1} parent=0 // pred_check
    _
  $region19: #{tpu_custom_call.1} parent=0 // pred_check_branch
    %21 = sbr.rel (0) target = $region21
  $region20: #{tpu_custom_call.1} parent=0 // pred_region
    _
  $region21: #{tpu_custom_call.1} parent=0 // pred_fallthru
    _
  %v22 = vld [vmem:[%s0] sm:$0xff]
  %v23 = vld [vmem:[%s0 + $0x8] sm:$0xff]
  %v24 = vld [vmem:[%s0 + $0x10] sm:$0xff]
  %v25 = vld [vmem:[%s0 + $0x18] sm:$0xff]
  %v26 = vld [vmem:[%s0 + $0x20] sm:$0xff]
  %v27 = vld [vmem:[%s0 + $0x28] sm:$0xff]
  %v28 = vld [vmem:[%s0 + $0x30] sm:$0xff]
  %v29 = vld [vmem:[%s0 + $0x38] sm:$0xff]
  %v30 = vld [vmem:[%s0 + $0x40] sm:$0xff]
  %v31 = vld [vmem:[%s0 + $0x48] sm:$0xff]
  %v32 = vld [vmem:[%s0 + $0x50] sm:$0xff]
  %v33 = vld [vmem:[%s0 + $0x58] sm:$0xff]
  %v34 = vld [vmem:[%s0 + $0x60] sm:$0xff]
  %v35 = vld [vmem:[%s0 + $0x68] sm:$0xff]
  %v36 = vld [vmem:[%s0 + $0x70] sm:$0xff]
  %v37 = vld [vmem:[%s0 + $0x78] sm:$0xff]
  %v38 = vld [vmem:[%s1] sm:$0xff]
  %v39 = vld [vmem:[%s2] sm:$0x1]
  %v41 = vperm.slane %v39, 0
  %vm43 = vcmask 64512
  %v45 = vsel %vm43, %v22, 0
  %v48 = vsel %vm43, %v23, 0
  %v51 = vsel %vm43, %v24, 0
  %v54 = vsel %vm43, %v25, 0
  %v57 = vsel %vm43, %v26, 0
  %v60 = vsel %vm43, %v27, 0
  %v63 = vsel %vm43, %v28, 0
  %v66 = vsel %vm43, %v29, 0
  %v69 = vsel %vm43, %v30, 0
  %v72 = vsel %vm43, %v31, 0
  %v75 = vsel %vm43, %v32, 0
  %v78 = vsel %vm43, %v33, 0
  %v81 = vsel %vm43, %v34, 0
  %v84 = vsel %vm43, %v35, 0
  %v87 = vsel %vm43, %v36, 0
  %v90 = vsel %vm43, %v37, 0
  %92 = vmatpush.msra.mxu0 0.0
  %93 = vmatpush.msra.mxu0 0.0
  %94 = vmatpush.msra.mxu0 0.0
  %95 = vmatpush.msra.mxu0 0.0
  %96 = vmatpush.msra.mxu0 0.0
  %97 = vmatpush.msra.mxu0 0.0
  %98 = vmatpush.msra.mxu0 0.0
  %99 = vmatpush.msra.mxu0 0.0
  %100 = vmatpush.msra.mxu0 0.0
  %101 = vmatpush.msra.mxu0 0.0
  %102 = vmatpush.msra.mxu0 0.0
  %103 = vmatpush.msra.mxu0 0.0
  %104 = vmatpush.msra.mxu0 0.0
  %105 = vmatpush.msra.mxu0 0.0
  %106 = vmatpush.msra.mxu0 0.0
  %107 = vmatpush.msra.mxu0 %v38
  %108 = vmatmul.f32.gmra.mxu0 %v45
  %v109 = vpop.f32.mrf.mxu0
  %v110 = vadd.f32 %v41, %v109
  %111 = vmatmul.f32.gmra.mxu0 %v48
  %v112 = vpop.f32.mrf.mxu0
  %v113 = vadd.f32 %v41, %v112
  %114 = vmatmul.f32.gmra.mxu0 %v51
  %v115 = vpop.f32.mrf.mxu0
  %v116 = vadd.f32 %v41, %v115
  %117 = vmatmul.f32.gmra.mxu0 %v54
  %v118 = vpop.f32.mrf.mxu0
  %v119 = vadd.f32 %v41, %v118
  %120 = vmatmul.f32.gmra.mxu0 %v57
  %v121 = vpop.f32.mrf.mxu0
  %v122 = vadd.f32 %v41, %v121
  %123 = vmatmul.f32.gmra.mxu0 %v60
  %v124 = vpop.f32.mrf.mxu0
  %v125 = vadd.f32 %v41, %v124
  %126 = vmatmul.f32.gmra.mxu0 %v63
  %v127 = vpop.f32.mrf.mxu0
  %v128 = vadd.f32 %v41, %v127
  %129 = vmatmul.f32.gmra.mxu0 %v66
  %v130 = vpop.f32.mrf.mxu0
  %v131 = vadd.f32 %v41, %v130
  %132 = vmatmul.f32.gmra.mxu0 %v69
  %v133 = vpop.f32.mrf.mxu0
  %v134 = vadd.f32 %v41, %v133
  %135 = vmatmul.f32.gmra.mxu0 %v72
  %v136 = vpop.f32.mrf.mxu0
  %v137 = vadd.f32 %v41, %v136
  %138 = vmatmul.f32.gmra.mxu0 %v75
  %v139 = vpop.f32.mrf.mxu0
  %v140 = vadd.f32 %v41, %v139
  %141 = vmatmul.f32.gmra.mxu0 %v78
  %v142 = vpop.f32.mrf.mxu0
  %v143 = vadd.f32 %v41, %v142
  %144 = vmatmul.f32.gmra.mxu0 %v81
  %v145 = vpop.f32.mrf.mxu0
  %v146 = vadd.f32 %v41, %v145
  %147 = vmatmul.f32.gmra.mxu0 %v84
  %v148 = vpop.f32.mrf.mxu0
  %v149 = vadd.f32 %v41, %v148
  %150 = vmatmul.f32.gmra.mxu0 %v87
  %v151 = vpop.f32.mrf.mxu0
  %v152 = vadd.f32 %v41, %v151
  %153 = vmatmul.f32.gmra.mxu0 %v90
  %v154 = vpop.f32.mrf.mxu0
  %v155 = vadd.f32 %v41, %v154
  %156 = vdwg.mxu0
  %v157 = vmax.f32 %v110, 0.0
  %v158 = vmax.f32 %v113, 0.0
  %v159 = vmax.f32 %v116, 0.0
  %v160 = vmax.f32 %v119, 0.0
  %v161 = vmax.f32 %v122, 0.0
  %v162 = vmax.f32 %v125, 0.0
  %v163 = vmax.f32 %v128, 0.0
  %v164 = vmax.f32 %v131, 0.0
  %v165 = vmax.f32 %v134, 0.0
  %v166 = vmax.f32 %v137, 0.0
  %v167 = vmax.f32 %v140, 0.0
  %v168 = vmax.f32 %v143, 0.0
  %v169 = vmax.f32 %v146, 0.0
  %v170 = vmax.f32 %v149, 0.0
  %v171 = vmax.f32 %v152, 0.0
  %v172 = vmax.f32 %v155, 0.0
  %vm173 = vcmask 130048
  %174 = vst.msk [vmem:[%s5] sm:$0xff] %vm173, %v157
  %175 = vst.msk [vmem:[%s5 + $0x8] sm:$0xff] %vm173, %v158
  %176 = vst.msk [vmem:[%s5 + $0x10] sm:$0xff] %vm173, %v159
  %177 = vst.msk [vmem:[%s5 + $0x18] sm:$0xff] %vm173, %v160
  %178 = vst.msk [vmem:[%s5 + $0x20] sm:$0xff] %vm173, %v161
  %179 = vst.msk [vmem:[%s5 + $0x28] sm:$0xff] %vm173, %v162
  %180 = vst.msk [vmem:[%s5 + $0x30] sm:$0xff] %vm173, %v163
  %181 = vst.msk [vmem:[%s5 + $0x38] sm:$0xff] %vm173, %v164
  %182 = vst.msk [vmem:[%s5 + $0x40] sm:$0xff] %vm173, %v165
  %183 = vst.msk [vmem:[%s5 + $0x48] sm:$0xff] %vm173, %v166
  %184 = vst.msk [vmem:[%s5 + $0x50] sm:$0xff] %vm173, %v167
  %185 = vst.msk [vmem:[%s5 + $0x58] sm:$0xff] %vm173, %v168
  %186 = vst.msk [vmem:[%s5 + $0x60] sm:$0xff] %vm173, %v169
  %187 = vst.msk [vmem:[%s5 + $0x68] sm:$0xff] %vm173, %v170
  %188 = vst.msk [vmem:[%s5 + $0x70] sm:$0xff] %vm173, %v171
  %189 = vst.msk [vmem:[%s5 + $0x78] sm:$0xff] %vm173, %v172
  %v190 = vld [vmem:[%s3] sm:$0xff]
  %v191 = vld [vmem:[%s4] sm:$0x1]
  %v193 = vperm.slane %v191, 0
  %195 = vmatpush.msra.mxu0 0.0
  %196 = vmatpush.msra.mxu0 0.0
  %197 = vmatpush.msra.mxu0 0.0
  %198 = vmatpush.msra.mxu0 0.0
  %199 = vmatpush.msra.mxu0 0.0
  %200 = vmatpush.msra.mxu0 0.0
  %201 = vmatpush.msra.mxu0 0.0
  %202 = vmatpush.msra.mxu0 0.0
  %203 = vmatpush.msra.mxu0 0.0
  %204 = vmatpush.msra.mxu0 0.0
  %205 = vmatpush.msra.mxu0 0.0
  %206 = vmatpush.msra.mxu0 0.0
  %207 = vmatpush.msra.mxu0 0.0
  %208 = vmatpush.msra.mxu0 0.0
  %209 = vmatpush.msra.mxu0 0.0
  %210 = vmatpush.msra.mxu0 %v190
  %211 = vmatmul.f32.gmra.mxu0 %v45
  %v212 = vpop.f32.mrf.mxu0
  %v213 = vadd.f32 %v193, %v212
  %214 = vmatmul.f32.gmra.mxu0 %v48
  %v215 = vpop.f32.mrf.mxu0
  %v216 = vadd.f32 %v193, %v215
  %217 = vmatmul.f32.gmra.mxu0 %v51
  %v218 = vpop.f32.mrf.mxu0
  %v219 = vadd.f32 %v193, %v218
  %220 = vmatmul.f32.gmra.mxu0 %v54
  %v221 = vpop.f32.mrf.mxu0
  %v222 = vadd.f32 %v193, %v221
  %223 = vmatmul.f32.gmra.mxu0 %v57
  %v224 = vpop.f32.mrf.mxu0
  %v225 = vadd.f32 %v193, %v224
  %226 = vmatmul.f32.gmra.mxu0 %v60
  %v227 = vpop.f32.mrf.mxu0
  %v228 = vadd.f32 %v193, %v227
  %229 = vmatmul.f32.gmra.mxu0 %v63
  %v230 = vpop.f32.mrf.mxu0
  %v231 = vadd.f32 %v193, %v230
  %232 = vmatmul.f32.gmra.mxu0 %v66
  %v233 = vpop.f32.mrf.mxu0
  %v234 = vadd.f32 %v193, %v233
  %235 = vmatmul.f32.gmra.mxu0 %v69
  %v236 = vpop.f32.mrf.mxu0
  %v237 = vadd.f32 %v193, %v236
  %238 = vmatmul.f32.gmra.mxu0 %v72
  %v239 = vpop.f32.mrf.mxu0
  %v240 = vadd.f32 %v193, %v239
  %241 = vmatmul.f32.gmra.mxu0 %v75
  %v242 = vpop.f32.mrf.mxu0
  %v243 = vadd.f32 %v193, %v242
  %244 = vmatmul.f32.gmra.mxu0 %v78
  %v245 = vpop.f32.mrf.mxu0
  %v246 = vadd.f32 %v193, %v245
  %247 = vmatmul.f32.gmra.mxu0 %v81
  %v248 = vpop.f32.mrf.mxu0
  %v249 = vadd.f32 %v193, %v248
  %250 = vmatmul.f32.gmra.mxu0 %v84
  %v251 = vpop.f32.mrf.mxu0
  %v252 = vadd.f32 %v193, %v251
  %253 = vmatmul.f32.gmra.mxu0 %v87
  %v254 = vpop.f32.mrf.mxu0
  %v255 = vadd.f32 %v193, %v254
  %256 = vmatmul.f32.gmra.mxu0 %v90
  %v257 = vpop.f32.mrf.mxu0
  %v258 = vadd.f32 %v193, %v257
  %259 = vdwg.mxu0
  %260 = vst.msk [vmem:[%s6] sm:$0xff] %vm173, %v213
  %261 = vst.msk [vmem:[%s6 + $0x8] sm:$0xff] %vm173, %v216
  %262 = vst.msk [vmem:[%s6 + $0x10] sm:$0xff] %vm173, %v219
  %263 = vst.msk [vmem:[%s6 + $0x18] sm:$0xff] %vm173, %v222
  %264 = vst.msk [vmem:[%s6 + $0x20] sm:$0xff] %vm173, %v225
  %265 = vst.msk [vmem:[%s6 + $0x28] sm:$0xff] %vm173, %v228
  %266 = vst.msk [vmem:[%s6 + $0x30] sm:$0xff] %vm173, %v231
  %267 = vst.msk [vmem:[%s6 + $0x38] sm:$0xff] %vm173, %v234
  %268 = vst.msk [vmem:[%s6 + $0x40] sm:$0xff] %vm173, %v237
  %269 = vst.msk [vmem:[%s6 + $0x48] sm:$0xff] %vm173, %v240
  %270 = vst.msk [vmem:[%s6 + $0x50] sm:$0xff] %vm173, %v243
  %271 = vst.msk [vmem:[%s6 + $0x58] sm:$0xff] %vm173, %v246
  %272 = vst.msk [vmem:[%s6 + $0x60] sm:$0xff] %vm173, %v249
  %273 = vst.msk [vmem:[%s6 + $0x68] sm:$0xff] %vm173, %v252
  %274 = vst.msk [vmem:[%s6 + $0x70] sm:$0xff] %vm173, %v255
  %275 = vst.msk [vmem:[%s6 + $0x78] sm:$0xff] %vm173, %v258
  // Predicated region
  $region22: #{tpu_custom_call.1} parent=0 // pred_check
    _
  $region23: #{tpu_custom_call.1} parent=0 // pred_check_branch
    %277 = sbr.rel (0) target = $region25
  $region24: #{tpu_custom_call.1} parent=0 // pred_region
    _
  $region25: #{tpu_custom_call.1} parent=0 // pred_fallthru
    _
  // Predicated region
  $region26: #{tpu_custom_call.1} parent=0 // pred_check
    _
  $region27: #{tpu_custom_call.1} parent=0 // pred_check_branch
    %279 = sbr.rel (0) target = $region29
  $region28: #{tpu_custom_call.1} parent=0 // pred_region
    _
  $region29: #{tpu_custom_call.1} parent=0 // pred_fallthru
    _
  // Predicated region
  $region30: #{tpu_custom_call.1} parent=0 // pred_check
    _
  $region31: #{tpu_custom_call.1} parent=0 // pred_check_branch
    %281 = sbr.rel (0) target = $region33
  $region32: #{tpu_custom_call.1} parent=0 // pred_region
    _
  $region33: #{tpu_custom_call.1} parent=0 // pred_fallthru
    _
  // Predicated region
  $region34: #{tpu_custom_call.1} parent=0 // pred_check
    _
  $region35: #{tpu_custom_call.1} parent=0 // pred_check_branch
    %283 = sbr.rel (0) target = $region37
  $region36: #{tpu_custom_call.1} parent=0 // pred_region
    _
  $region37: #{tpu_custom_call.1} parent=0 // pred_fallthru
    _

</llo_original>
